<compile_context>
chip_gen: v7x
topology: tpu7x:2x2x1
jax: 0.10.0
libtpu: 0.0.40
codegen_flags: <defaults>
</compile_context>

<pallas_src>
import functools

import jax
import jax.numpy as jnp
from jax.experimental import pallas as pl
from jax.experimental.pallas import tpu as pltpu


def _round_up(x, m):
    return (x + m - 1) // m * m


def _build_poly(x_f32, order):
    """[x, x**2, ..., x**(order-1)] concatenated along the lane axis (f32)."""
    powers = []
    x_pow = x_f32
    for k in range(1, order):          # order is small & static -> unrolled
        powers.append(x_pow)
        if k + 1 < order:
            x_pow = x_pow * x_f32
    if len(powers) == 1:
        return powers[0]
    return jnp.concatenate(powers, axis=-1)


def _taylor_kernel_reg(x_ref, w_ref, b_ref, o_ref, *, order, mxu_dtype):
    # Register-resident polynomial features (single output tile per row tile).
    xp = _build_poly(x_ref[...].astype(jnp.float32), order).astype(mxu_dtype)
    acc = jnp.dot(xp, w_ref[...], preferred_element_type=jnp.float32)
    o_ref[...] = (acc + b_ref[...]).astype(o_ref.dtype)


def _taylor_kernel_scratch(x_ref, w_ref, b_ref, o_ref, xp_ref, *, order,
                           mxu_dtype):
    # Polynomial features built ONCE per row tile (j == 0) into a persistent
    # mxu_dtype VMEM scratch; reused for every output tile j.
    del mxu_dtype  # scratch already carries the MXU dtype
    @pl.when(pl.program_id(1) == 0)
    def _():
        xp_ref[...] = _build_poly(x_ref[...].astype(jnp.float32),
                                  order).astype(xp_ref.dtype)

    acc = jnp.dot(xp_ref[...], w_ref[...], preferred_element_type=jnp.float32)
    o_ref[...] = (acc + b_ref[...]).astype(o_ref.dtype)


def taylor_layer(x, coeffs, bias=None, *, tile_n=4096, mxu_dtype=jnp.bfloat16):
    """Pallas TaylorLayer forward.

    x:      (..., input_dim)              float32
    coeffs: (out_dim, input_dim, order)   (PyTorch parameter layout)
    bias:   (1, out_dim), (out_dim,) or None
    returns (..., out_dim)                float32

    Note: mxu_dtype=jnp.bfloat16 casts the (f32-built) polynomial features and
    weights for the MXU; for wide activations or large `order`, pass
    mxu_dtype=jnp.float32 for an exact path.
    """
    out_dim, input_dim, order = coeffs.shape
    orig_shape = x.shape
    assert orig_shape[-1] == input_dim

    x2 = jnp.reshape(x, (-1, input_dim)).astype(jnp.float32)
    n = x2.shape[0]
    coeffs = coeffs.astype(jnp.float32)

    # Fold the k=0 term (x**0 == 1, matching torch's 0**0 == 1) into the bias.
    if order >= 1:
        eff_bias = jnp.sum(coeffs[:, :, 0], axis=1)[None, :]       # (1, out_dim)
    else:
        eff_bias = jnp.zeros((1, out_dim), dtype=jnp.float32)
    if bias is not None:
        eff_bias = eff_bias + bias.astype(jnp.float32).reshape(1, out_dim)

    if order <= 1:
        # No data-dependent terms: output is just the (effective) bias.
        y = jnp.broadcast_to(eff_bias, (n, out_dim))
        return jnp.reshape(y, orig_shape[:-1] + (out_dim,))

    # Fused weight matrix: ((order-1)*input_dim, out_dim); row block (k-1)
    # holds the power-k coefficients.
    k_fused = (order - 1) * input_dim
    w = jnp.transpose(coeffs[:, :, 1:], (2, 1, 0)).reshape(k_fused, out_dim)
    w = w.astype(mxu_dtype)
    b = eff_bias                                                   # (1, out_dim) f32

    # Output tiling: lane-dense 128/256-wide tiles only when out_dim is already
    # a 128-multiple; otherwise one full-extent tile (no padding, no host slice).
    if out_dim % 128 == 0:
        tile_no = 256 if out_dim % 256 == 0 else 128
        n_j = out_dim // tile_no
    else:
        tile_no = out_dim
        n_j = 1
    use_scratch = n_j > 1   # reuse polynomial features across output tiles

    w_bytes = jnp.dtype(mxu_dtype).itemsize

    # Generation-aware VMEM budget (v7x: 64 MiB physical; v5e/v6e: 128 MiB).
    try:
        vmem_cap = int(pltpu.get_tpu_info().vmem_capacity_bytes)
    except Exception:
        vmem_cap = 64 * 1024 * 1024        # conservative fallback (v7x-sized)
    budget = min(int(0.625 * vmem_cap), 48 * 1024 * 1024)   # v7x ~40 MiB
    limit_cap = min(int(0.75 * vmem_cap), 96 * 1024 * 1024)  # v7x 48 MiB

    def est_vmem(tn):
        return (2 * tn * input_dim * 4                 # x (double-buffered)
                + 2 * k_fused * tile_no * w_bytes      # weights
                + 2 * tn * tile_no * 4                 # output
                + tn * k_fused * (4 + w_bytes)         # poly feats + f32 temps
                + 2 * 8 * max(tile_no, 128) * 4        # bias
                + (1 << 20))                           # slack

    # Row tile: big (amortize per-step overhead), multiple of 128, shrunk by
    # halving until the estimated footprint fits the budget.
    tile_n_eff = max(128, min(_round_up(tile_n, 128), _round_up(n, 128)))
    while est_vmem(tile_n_eff) > budget and tile_n_eff > 128:
        tile_n_eff = max(128, _round_up(tile_n_eff // 2, 128))

    grid = (pl.cdiv(n, tile_n_eff), n_j)

    # Always set the scoped VMEM limit (v5e default is only 16 MiB).
    vmem_limit = int(min(limit_cap,
                         max(int(1.5 * est_vmem(tile_n_eff)), 32 * 1024 * 1024)))

    if use_scratch:
        kernel = functools.partial(_taylor_kernel_scratch, order=order,
                                   mxu_dtype=mxu_dtype)
        scratch_shapes = [pltpu.VMEM((tile_n_eff, k_fused), mxu_dtype)]
    else:
        kernel = functools.partial(_taylor_kernel_reg, order=order,
                                   mxu_dtype=mxu_dtype)
        scratch_shapes = []

    y = pl.pallas_call(
        kernel,
        out_shape=jax.ShapeDtypeStruct((n, out_dim), jnp.float32),
        grid_spec=pltpu.PrefetchScalarGridSpec(
            num_scalar_prefetch=0,
            grid=grid,
            in_specs=[
                pl.BlockSpec((tile_n_eff, input_dim), lambda i, j: (i, 0)),
                pl.BlockSpec((k_fused, tile_no), lambda i, j: (0, j)),
                pl.BlockSpec((1, tile_no), lambda i, j: (0, j)),
            ],
            out_specs=pl.BlockSpec((tile_n_eff, tile_no), lambda i, j: (i, j)),
            scratch_shapes=scratch_shapes,
        ),
        compiler_params=pltpu.CompilerParams(
            # Rows split across cores (v7x megacore); output-tile axis kept
            # sequential so the scratch-reuse hoist stays valid.
            dimension_semantics=("parallel", "arbitrary"),
            vmem_limit_bytes=vmem_limit),
    )(x2, w, b)

    return jnp.reshape(y, orig_shape[:-1] + (out_dim,))


def taylor_layer_ref(x, coeffs, bias=None):
    """Pure-JAX reference mirroring the PyTorch forward exactly."""
    out_dim, input_dim, order = coeffs.shape
    shape = x.shape
    x2 = jnp.reshape(x, (-1, input_dim)).astype(jnp.float32)
    x_expanded = x2[:, None, :]  # (N, 1, input_dim) broadcasts against out_dim
    y = jnp.zeros((x2.shape[0], out_dim), dtype=jnp.float32)
    for i in range(order):
        term = (x_expanded ** i) * coeffs[:, :, i]
        y = y + term.sum(axis=-1)
    if bias is not None:
        y = y + bias
    return jnp.reshape(y, shape[:-1] + (out_dim,))


if __name__ == "__main__":
    key = jax.random.PRNGKey(0)

    # ---- Config 1: small out_dim (not a 128-multiple) -> full-extent output
    #      block, register-resident polynomial features (no scratch). ----
    batch, seq, spatial, input_dim = 2, 4, 16, 8
    out_dim, order = 16, 3
    k1, k2, key = jax.random.split(key, 3)
    x = jax.random.normal(k1, (batch, seq, spatial, input_dim), dtype=jnp.float32)
    coeffs = jax.random.normal(k2, (out_dim, input_dim, order),
                               dtype=jnp.float32) * 0.01
    bias = jnp.zeros((1, out_dim), dtype=jnp.float32)

    y_ref = taylor_layer_ref(x, coeffs, bias)

    y_f32 = jax.block_until_ready(
        taylor_layer(x, coeffs, bias, mxu_dtype=jnp.float32))
    assert y_f32.shape == (batch, seq, spatial, out_dim)
    assert jnp.allclose(y_f32, y_ref, atol=1e-5, rtol=1e-5)

    y_bf16 = jax.block_until_ready(taylor_layer(x, coeffs, bias))
    assert y_bf16.shape == (batch, seq, spatial, out_dim)
    assert jnp.allclose(y_bf16, y_ref, atol=2e-2, rtol=2e-2)

    # No-bias path (exercises the k=0 -> effective-bias folding alone).
    y_nb = jax.block_until_ready(
        taylor_layer(x, coeffs, None, mxu_dtype=jnp.float32))
    assert jnp.allclose(y_nb, taylor_layer_ref(x, coeffs, None),
                        atol=1e-5, rtol=1e-5)

    # ---- Config 2: out_dim a multiple of 128 with several output tiles ->
    #      lane-dense tiling + persistent VMEM feature scratch built at j==0. ----
    b2, s2, input_dim2 = 4, 8, 64
    out_dim2, order2 = 384, 4
    k3, k4, key = jax.random.split(key, 3)
    x_big = jax.random.normal(k3, (b2, s2, input_dim2), dtype=jnp.float32)
    coeffs2 = jax.random.normal(k4, (out_dim2, input_dim2, order2),
                                dtype=jnp.float32) * 0.01
    bias2 = jnp.zeros((1, out_dim2), dtype=jnp.float32)

    y2_ref = taylor_layer_ref(x_big, coeffs2, bias2)

    y2_f32 = jax.block_until_ready(
        taylor_layer(x_big, coeffs2, bias2, mxu_dtype=jnp.float32))
    assert y2_f32.shape == (b2, s2, out_dim2)
    assert jnp.allclose(y2_f32, y2_ref, atol=1e-4, rtol=1e-4)

    y2_bf16 = jax.block_until_ready(taylor_layer(x_big, coeffs2, bias2))
    assert jnp.allclose(y2_bf16, y2_ref, atol=5e-2, rtol=5e-2)

    print("KERNEL_OK")
</pallas_src>

<mosaic_0001>
module attributes {stable_mosaic.version = 11 : i64} {
  func.func @_taylor_kernel_reg(%arg0: i32, %arg1: i32, %arg2: memref<128x8xf32, #tpu.memory_space<vmem>>, %arg3: memref<16x16xf32, #tpu.memory_space<vmem>>, %arg4: memref<1x16xf32, #tpu.memory_space<vmem>>, %arg5: memref<128x16xf32, #tpu.memory_space<vmem>>) attributes {dimension_semantics = [#tpu.dimension_semantics<parallel>, #tpu.dimension_semantics<arbitrary>], iteration_bounds = array<i64: 1, 1>, scalar_prefetch = 0 : i64, scratch_operands = 0 : i64, tpu.core_type = #tpu.core_type<tc>, window_params = [{transform_indices = @transform_0, window_bounds = array<i64: 128, 8>}, {transform_indices = @transform_1, window_bounds = array<i64: 16, 16>}, {transform_indices = @transform_2, window_bounds = array<i64: 1, 16>}, {transform_indices = @transform_3, window_bounds = array<i64: 128, 16>}]} {
    %c0 = arith.constant 0 : index
    %c0_0 = arith.constant 0 : index
    %0 = vector.load %arg2[%c0, %c0_0] : memref<128x8xf32, #tpu.memory_space<vmem>>, vector<128x8xf32>
    %1 = arith.mulf %0, %0 : vector<128x8xf32>
    %2 = tpu.concatenate %0, %1 in 1 : vector<128x8xf32>, vector<128x8xf32> -> vector<128x16xf32>
    %c0_1 = arith.constant 0 : index
    %c0_2 = arith.constant 0 : index
    %3 = vector.load %arg3[%c0_1, %c0_2] : memref<16x16xf32, #tpu.memory_space<vmem>>, vector<16x16xf32>
    %cst = arith.constant dense<0.000000e+00> : vector<128x16xf32>
    %4 = tpu.matmul %2, %3, %cst {dimension_numbers = #tpu.dot_dimension_numbers<[1], [0], [0], [1], [0, 0, 1, 1], [], []>} : vector<128x16xf32>, vector<16x16xf32>, vector<128x16xf32> -> vector<128x16xf32>
    %c0_3 = arith.constant 0 : index
    %c0_4 = arith.constant 0 : index
    %5 = vector.load %arg4[%c0_3, %c0_4] : memref<1x16xf32, #tpu.memory_space<vmem>>, vector<1x16xf32>
    %6 = vector.broadcast %5 : vector<1x16xf32> to vector<128x16xf32>
    %7 = arith.addf %4, %6 : vector<128x16xf32>
    %c0_5 = arith.constant 0 : index
    %c0_6 = arith.constant 0 : index
    %8 = vector.load %arg5[%c0_5, %c0_6] : memref<128x16xf32, #tpu.memory_space<vmem>>, vector<128x16xf32>
    tpu.vector_store %arg5[%c0_5, %c0_6], %7 {strides = array<i32>} : memref<128x16xf32, #tpu.memory_space<vmem>>, vector<128x16xf32>,
    return
  }
  func.func @transform_0(%arg0: i32, %arg1: i32) -> (i32, i32) {
    %c0_i32 = arith.constant 0 : i32
    %c0_i32_0 = arith.constant 0 : i32
    return %arg0, %c0_i32 : i32, i32
  }
  func.func @transform_1(%arg0: i32, %arg1: i32) -> (i32, i32) {
    %c0_i32 = arith.constant 0 : i32
    %c0_i32_0 = arith.constant 0 : i32
    return %c0_i32, %arg1 : i32, i32
  }
  func.func @transform_2(%arg0: i32, %arg1: i32) -> (i32, i32) {
    %c0_i32 = arith.constant 0 : i32
    %c0_i32_0 = arith.constant 0 : i32
    return %c0_i32, %arg1 : i32, i32
  }
  func.func @transform_3(%arg0: i32, %arg1: i32) -> (i32, i32) {
    %c0_i32 = arith.constant 0 : i32
    return %arg0, %arg1 : i32, i32
  }
}

</mosaic_0001>

<llo_original>
// kernel: tpu_custom_call.1
$region0: #{tpu_custom_call.1}
  #allocation0 [shape = 'u32[]', space=smem, size = 0x4, offset = 0x4, fixed_abs, tag = 'smem constant byte address 0x4 - core index']
  #allocation1 [shape = 'u32[144,128]{1,0:T(1,128)}', space=vmem, size = 0x12000, scoped, tag = 'internal scratch']
  %s0 = inlined_call_operand.vmem [shape: f32[128,8], index: 0, kind: input, shape index: {}]
  %s1 = inlined_call_operand.vmem [shape: f32[16,16], index: 1, kind: input, shape index: {}]
  %s2 = inlined_call_operand.vmem [shape: f32[1,16], index: 2, kind: input, shape index: {}]
  %s3 = inlined_call_operand.vmem [shape: f32[128,16], index: 3, kind: output, shape index: {}]
  %s4 = sld [smem:[#allocation0]]
  $region22: #{tpu_custom_call.1} parent=0
    _
  %s6 = ssub.s32 1, %s4
  %s7 = scalar_select 0, %s6, %s4
  // Predicated region
  $region2: #{tpu_custom_call.1} parent=0 // pred_check
    _
  $region3: #{tpu_custom_call.1} parent=0 // pred_check_branch
    %9 = sbr.rel (0) target = $region5
  $region4: #{tpu_custom_call.1} parent=0 // pred_region
    _
  $region5: #{tpu_custom_call.1} parent=0 // pred_fallthru
    _
  // Predicated region
  $region6: #{tpu_custom_call.1} parent=0 // pred_check
    _
  $region7: #{tpu_custom_call.1} parent=0 // pred_check_branch
    %11 = sbr.rel (0) target = $region9
  $region8: #{tpu_custom_call.1} parent=0 // pred_region
    _
  $region9: #{tpu_custom_call.1} parent=0 // pred_fallthru
    _
  // Predicated region
  $region10: #{tpu_custom_call.1} parent=0 // pred_check
    _
  $region11: #{tpu_custom_call.1} parent=0 // pred_check_branch
    %13 = sbr.rel (0) target = $region13
  $region12: #{tpu_custom_call.1} parent=0 // pred_region
    _
  $region13: #{tpu_custom_call.1} parent=0 // pred_fallthru
    _
  %v14 = vld [vmem:[%s0] sm:$0xff]
  %v15 = vld [vmem:[%s0 + $0x8] sm:$0xff]
  %v16 = vld [vmem:[%s0 + $0x10] sm:$0xff]
  %v17 = vld [vmem:[%s0 + $0x18] sm:$0xff]
  %v18 = vld [vmem:[%s0 + $0x20] sm:$0xff]
  %v19 = vld [vmem:[%s0 + $0x28] sm:$0xff]
  %v20 = vld [vmem:[%s0 + $0x30] sm:$0xff]
  %v21 = vld [vmem:[%s0 + $0x38] sm:$0xff]
  %v22 = vld [vmem:[%s0 + $0x40] sm:$0xff]
  %v23 = vld [vmem:[%s0 + $0x48] sm:$0xff]
  %v24 = vld [vmem:[%s0 + $0x50] sm:$0xff]
  %v25 = vld [vmem:[%s0 + $0x58] sm:$0xff]
  %v26 = vld [vmem:[%s0 + $0x60] sm:$0xff]
  %v27 = vld [vmem:[%s0 + $0x68] sm:$0xff]
  %v28 = vld [vmem:[%s0 + $0x70] sm:$0xff]
  %v29 = vld [vmem:[%s0 + $0x78] sm:$0xff]
  %v30 = vmul.f32 %v14, %v14
  %v31 = vmul.f32 %v15, %v15
  %v32 = vmul.f32 %v16, %v16
  %v33 = vmul.f32 %v17, %v17
  %v34 = vmul.f32 %v18, %v18
  %v35 = vmul.f32 %v19, %v19
  %v36 = vmul.f32 %v20, %v20
  %v37 = vmul.f32 %v21, %v21
  %v38 = vmul.f32 %v22, %v22
  %v39 = vmul.f32 %v23, %v23
  %v40 = vmul.f32 %v24, %v24
  %v41 = vmul.f32 %v25, %v25
  %v42 = vmul.f32 %v26, %v26
  %v43 = vmul.f32 %v27, %v27
  %v44 = vmul.f32 %v28, %v28
  %v45 = vmul.f32 %v29, %v29
  %62 = vrot.lane.b32.xlu0 %v30, 8
  %v63 = vpop.permute.xlu0 %62
  %64 = vrot.lane.b32.xlu0 %v31, 8
  %v65 = vpop.permute.xlu0 %64
  %66 = vrot.lane.b32.xlu0 %v32, 8
  %v67 = vpop.permute.xlu0 %66
  %68 = vrot.lane.b32.xlu0 %v33, 8
  %v69 = vpop.permute.xlu0 %68
  %70 = vrot.lane.b32.xlu0 %v34, 8
  %v71 = vpop.permute.xlu0 %70
  %72 = vrot.lane.b32.xlu0 %v35, 8
  %v73 = vpop.permute.xlu0 %72
  %74 = vrot.lane.b32.xlu0 %v36, 8
  %v75 = vpop.permute.xlu0 %74
  %76 = vrot.lane.b32.xlu0 %v37, 8
  %v77 = vpop.permute.xlu0 %76
  %78 = vrot.lane.b32.xlu0 %v38, 8
  %v79 = vpop.permute.xlu0 %78
  %80 = vrot.lane.b32.xlu0 %v39, 8
  %v81 = vpop.permute.xlu0 %80
  %82 = vrot.lane.b32.xlu0 %v40, 8
  %v83 = vpop.permute.xlu0 %82
  %84 = vrot.lane.b32.xlu0 %v41, 8
  %v85 = vpop.permute.xlu0 %84
  %86 = vrot.lane.b32.xlu0 %v42, 8
  %v87 = vpop.permute.xlu0 %86
  %88 = vrot.lane.b32.xlu0 %v43, 8
  %v89 = vpop.permute.xlu0 %88
  %90 = vrot.lane.b32.xlu0 %v44, 8
  %v91 = vpop.permute.xlu0 %90
  %92 = vrot.lane.b32.xlu0 %v45, 8
  %v93 = vpop.permute.xlu0 %92
  %vm110 = vcmask 64512
  %v111 = vsel %vm110, %v14, %v63
  %v112 = vsel %vm110, %v15, %v65
  %v113 = vsel %vm110, %v16, %v67
  %v114 = vsel %vm110, %v17, %v69
  %v115 = vsel %vm110, %v18, %v71
  %v116 = vsel %vm110, %v19, %v73
  %v117 = vsel %vm110, %v20, %v75
  %v118 = vsel %vm110, %v21, %v77
  %v119 = vsel %vm110, %v22, %v79
  %v120 = vsel %vm110, %v23, %v81
  %v121 = vsel %vm110, %v24, %v83
  %v122 = vsel %vm110, %v25, %v85
  %v123 = vsel %vm110, %v26, %v87
  %v124 = vsel %vm110, %v27, %v89
  %v125 = vsel %vm110, %v28, %v91
  %v126 = vsel %vm110, %v29, %v93
  %v127 = vld [vmem:[%s1] sm:$0xff]
  %v128 = vld [vmem:[%s1 + $0x8] sm:$0xff]
  %v129 = vld [vmem:[%s2] sm:$0x1]
  %v131 = vlaneseq
  %v132 = vshrl.u32 %v131, 7
  %v133 = vsub.s32 0, %v132
  %v134 = vrot.slane %v129, %v133
  %vm136 = vcmask 130048
  %v138 = vsel %vm136, %v111, 0
  %v141 = vsel %vm136, %v112, 0
  %v144 = vsel %vm136, %v113, 0
  %v147 = vsel %vm136, %v114, 0
  %v150 = vsel %vm136, %v115, 0
  %v153 = vsel %vm136, %v116, 0
  %v156 = vsel %vm136, %v117, 0
  %v159 = vsel %vm136, %v118, 0
  %v162 = vsel %vm136, %v119, 0
  %v165 = vsel %vm136, %v120, 0
  %v168 = vsel %vm136, %v121, 0
  %v171 = vsel %vm136, %v122, 0
  %v174 = vsel %vm136, %v123, 0
  %v177 = vsel %vm136, %v124, 0
  %v180 = vsel %vm136, %v125, 0
  %v183 = vsel %vm136, %v126, 0
  %185 = vmatprep.subr.mxu0 0.0
  %186 = vmatpush1.msra.mxu0 %v127
  %187 = vmatprep.subr.mxu0 0.0
  %188 = vmatpush1.msra.mxu0 %v128
  %189 = vmatprep.subr.mxu0 0.0
  %190 = vmatpush1.msra.mxu0 0.0
  %191 = vmatprep.subr.mxu0 0.0
  %192 = vmatpush1.msra.mxu0 0.0
  %193 = vmatprep.subr.mxu0 0.0
  %194 = vmatpush1.msra.mxu0 0.0
  %195 = vmatprep.subr.mxu0 0.0
  %196 = vmatpush1.msra.mxu0 0.0
  %197 = vmatprep.subr.mxu0 0.0
  %198 = vmatpush1.msra.mxu0 0.0
  %199 = vmatprep.subr.mxu0 0.0
  %200 = vmatpush1.msra.mxu0 0.0
  %201 = vmatprep.subr.mxu0 0.0
  %202 = vmatpush1.msra.mxu0 0.0
  %203 = vmatprep.subr.mxu0 0.0
  %204 = vmatpush1.msra.mxu0 0.0
  %205 = vmatprep.subr.mxu0 0.0
  %206 = vmatpush1.msra.mxu0 0.0
  %207 = vmatprep.subr.mxu0 0.0
  %208 = vmatpush1.msra.mxu0 0.0
  %209 = vmatprep.subr.mxu0 0.0
  %210 = vmatpush1.msra.mxu0 0.0
  %211 = vmatprep.subr.mxu0 0.0
  %212 = vmatpush1.msra.mxu0 0.0
  %213 = vmatprep.subr.mxu0 0.0
  %214 = vmatpush1.msra.mxu0 0.0
  %215 = vmatprep.subr.mxu0 0.0
  %216 = vmatpush1.msra.mxu0 0.0
  %217 = vmatprep.subr.mxu0 0.0
  %218 = vmatpush1.msra.mxu0 0.0
  %219 = vmatprep.subr.mxu0 0.0
  %220 = vmatpush1.msra.mxu0 0.0
  %221 = vmatprep.subr.mxu0 0.0
  %222 = vmatpush1.msra.mxu0 0.0
  %223 = vmatprep.subr.mxu0 0.0
  %224 = vmatpush1.msra.mxu0 0.0
  %225 = vmatprep.subr.mxu0 0.0
  %226 = vmatpush1.msra.mxu0 0.0
  %227 = vmatprep.subr.mxu0 0.0
  %228 = vmatpush1.msra.mxu0 0.0
  %229 = vmatprep.subr.mxu0 0.0
  %230 = vmatpush1.msra.mxu0 0.0
  %231 = vmatprep.subr.mxu0 0.0
  %232 = vmatpush1.msra.mxu0 0.0
  %233 = vmatprep.subr.mxu0 0.0
  %234 = vmatpush1.msra.mxu0 0.0
  %235 = vmatprep.subr.mxu0 0.0
  %236 = vmatpush1.msra.mxu0 0.0
  %237 = vmatprep.subr.mxu0 0.0
  %238 = vmatpush1.msra.mxu0 0.0
  %239 = vmatprep.subr.mxu0 0.0
  %240 = vmatpush1.msra.mxu0 0.0
  %241 = vmatprep.subr.mxu0 0.0
  %242 = vmatpush1.msra.mxu0 0.0
  %243 = vmatprep.subr.mxu0 0.0
  %244 = vmatpush1.msra.mxu0 0.0
  %245 = vmatprep.subr.mxu0 0.0
  %246 = vmatpush1.msra.mxu0 0.0
  %247 = vmatprep.subr.mxu0 0.0
  %248 = vmatpush1.msra.mxu0 0.0
  %249 = vmatprep.mubr.f32.mxu0 0.0
  %250 = vmatmul.mubr.f32.gmra.mrb[0].mxu0 %v138
  %v251 = vpop.f32.mrb[0].mxu0
  %v252 = vadd.f32 %v134, %v251
  %v253 = vpop.f32.mrb[0].mxu0
  %254 = vmatprep.mubr.f32.mxu0 0.0
  %255 = vmatmul.mubr.f32.gmra.mrb[0].mxu0 %v141
  %v256 = vpop.f32.mrb[0].mxu0
  %v257 = vadd.f32 %v134, %v256
  %v258 = vpop.f32.mrb[0].mxu0
  %259 = vmatprep.mubr.f32.mxu0 0.0
  %260 = vmatmul.mubr.f32.gmra.mrb[0].mxu0 %v144
  %v261 = vpop.f32.mrb[0].mxu0
  %v262 = vadd.f32 %v134, %v261
  %v263 = vpop.f32.mrb[0].mxu0
  %264 = vmatprep.mubr.f32.mxu0 0.0
  %265 = vmatmul.mubr.f32.gmra.mrb[0].mxu0 %v147
  %v266 = vpop.f32.mrb[0].mxu0
  %v267 = vadd.f32 %v134, %v266
  %v268 = vpop.f32.mrb[0].mxu0
  %269 = vmatprep.mubr.f32.mxu0 0.0
  %270 = vmatmul.mubr.f32.gmra.mrb[0].mxu0 %v150
  %v271 = vpop.f32.mrb[0].mxu0
  %v272 = vadd.f32 %v134, %v271
  %v273 = vpop.f32.mrb[0].mxu0
  %274 = vmatprep.mubr.f32.mxu0 0.0
  %275 = vmatmul.mubr.f32.gmra.mrb[0].mxu0 %v153
  %v276 = vpop.f32.mrb[0].mxu0
  %v277 = vadd.f32 %v134, %v276
  %v278 = vpop.f32.mrb[0].mxu0
  %279 = vmatprep.mubr.f32.mxu0 0.0
  %280 = vmatmul.mubr.f32.gmra.mrb[0].mxu0 %v156
  %v281 = vpop.f32.mrb[0].mxu0
  %v282 = vadd.f32 %v134, %v281
  %v283 = vpop.f32.mrb[0].mxu0
  %284 = vmatprep.mubr.f32.mxu0 0.0
  %285 = vmatmul.mubr.f32.gmra.mrb[0].mxu0 %v159
  %v286 = vpop.f32.mrb[0].mxu0
  %v287 = vadd.f32 %v134, %v286
  %v288 = vpop.f32.mrb[0].mxu0
  %289 = vmatprep.mubr.f32.mxu0 0.0
  %290 = vmatmul.mubr.f32.gmra.mrb[0].mxu0 %v162
  %v291 = vpop.f32.mrb[0].mxu0
  %v292 = vadd.f32 %v134, %v291
  %v293 = vpop.f32.mrb[0].mxu0
  %294 = vmatprep.mubr.f32.mxu0 0.0
  %295 = vmatmul.mubr.f32.gmra.mrb[0].mxu0 %v165
  %v296 = vpop.f32.mrb[0].mxu0
  %v297 = vadd.f32 %v134, %v296
  %v298 = vpop.f32.mrb[0].mxu0
  %299 = vmatprep.mubr.f32.mxu0 0.0
  %300 = vmatmul.mubr.f32.gmra.mrb[0].mxu0 %v168
  %v301 = vpop.f32.mrb[0].mxu0
  %v302 = vadd.f32 %v134, %v301
  %v303 = vpop.f32.mrb[0].mxu0
  %304 = vmatprep.mubr.f32.mxu0 0.0
  %305 = vmatmul.mubr.f32.gmra.mrb[0].mxu0 %v171
  %v306 = vpop.f32.mrb[0].mxu0
  %v307 = vadd.f32 %v134, %v306
  %v308 = vpop.f32.mrb[0].mxu0
  %309 = vmatprep.mubr.f32.mxu0 0.0
  %310 = vmatmul.mubr.f32.gmra.mrb[0].mxu0 %v174
  %v311 = vpop.f32.mrb[0].mxu0
  %v312 = vadd.f32 %v134, %v311
  %v313 = vpop.f32.mrb[0].mxu0
  %314 = vmatprep.mubr.f32.mxu0 0.0
  %315 = vmatmul.mubr.f32.gmra.mrb[0].mxu0 %v177
  %v316 = vpop.f32.mrb[0].mxu0
  %v317 = vadd.f32 %v134, %v316
  %v318 = vpop.f32.mrb[0].mxu0
  %319 = vmatprep.mubr.f32.mxu0 0.0
  %320 = vmatmul.mubr.f32.gmra.mrb[0].mxu0 %v180
  %v321 = vpop.f32.mrb[0].mxu0
  %v322 = vadd.f32 %v134, %v321
  %v323 = vpop.f32.mrb[0].mxu0
  %324 = vmatprep.mubr.f32.mxu0 0.0
  %325 = vmatmul.mubr.f32.gmra.mrb[0].mxu0 %v183
  %v326 = vpop.f32.mrb[0].mxu0
  %v327 = vadd.f32 %v134, %v326
  %v328 = vpop.f32.mrb[0].mxu0
  %329 = vdwg.mxu0
  %330 = vst.msk [vmem:[%s3] sm:$0xff] %vm136, %v252
  %331 = vst.msk [vmem:[%s3 + $0x8] sm:$0xff] %vm136, %v257
  %332 = vst.msk [vmem:[%s3 + $0x10] sm:$0xff] %vm136, %v262
  %333 = vst.msk [vmem:[%s3 + $0x18] sm:$0xff] %vm136, %v267
  %334 = vst.msk [vmem:[%s3 + $0x20] sm:$0xff] %vm136, %v272
  %335 = vst.msk [vmem:[%s3 + $0x28] sm:$0xff] %vm136, %v277
  %336 = vst.msk [vmem:[%s3 + $0x30] sm:$0xff] %vm136, %v282
  %337 = vst.msk [vmem:[%s3 + $0x38] sm:$0xff] %vm136, %v287
  %338 = vst.msk [vmem:[%s3 + $0x40] sm:$0xff] %vm136, %v292
  %339 = vst.msk [vmem:[%s3 + $0x48] sm:$0xff] %vm136, %v297
  %340 = vst.msk [vmem:[%s3 + $0x50] sm:$0xff] %vm136, %v302
  %341 = vst.msk [vmem:[%s3 + $0x58] sm:$0xff] %vm136, %v307
  %342 = vst.msk [vmem:[%s3 + $0x60] sm:$0xff] %vm136, %v312
  %343 = vst.msk [vmem:[%s3 + $0x68] sm:$0xff] %vm136, %v317
  %344 = vst.msk [vmem:[%s3 + $0x70] sm:$0xff] %vm136, %v322
  %345 = vst.msk [vmem:[%s3 + $0x78] sm:$0xff] %vm136, %v327
  // Predicated region
  $region14: #{tpu_custom_call.1} parent=0 // pred_check
    _
  $region15: #{tpu_custom_call.1} parent=0 // pred_check_branch
    %347 = sbr.rel (0) target = $region17
  $region16: #{tpu_custom_call.1} parent=0 // pred_region
    _
  $region17: #{tpu_custom_call.1} parent=0 // pred_fallthru
    _
  // Predicated region
  $region18: #{tpu_custom_call.1} parent=0 // pred_check
    _
  $region19: #{tpu_custom_call.1} parent=0 // pred_check_branch
    %349 = sbr.rel (0) target = $region21
  $region20: #{tpu_custom_call.1} parent=0 // pred_region
    _
  $region21: #{tpu_custom_call.1} parent=0 // pred_fallthru
    _

</llo_original>
